<compile_context>
chip_gen: v5e
topology: v5e:2x2
jax: 0.10.0
libtpu: 0.0.40
codegen_flags: <defaults>
</compile_context>

<pallas_src>
import numpy as np
import jax
import jax.numpy as jnp
from jax.experimental import pallas as pl
from jax.experimental.pallas import tpu as pltpu

# Opt-in (changes numerics slightly): cast matmul operands to bf16 to hit the
# bf16 MXU peak on v6e/v7x and halve HBM traffic; the accumulator stays f32.
_USE_BF16_OPERANDS = False


# ------------------------------ small helpers --------------------------------
def _round_up(x, m):
    return ((x + m - 1) // m) * m


def _cdiv(a, b):
    return (a + b - 1) // b


def _pick_divisor(dim, candidates):
    for c in candidates:
        if c <= dim and dim % c == 0:
            return c
    return dim


def _vmem_budget():
    """(working-set budget bytes, vmem_limit_bytes) sized per TPU generation."""
    try:
        cap = int(pltpu.get_tpu_info().vmem_capacity_bytes)
    except Exception:
        cap = 64 * 1024 * 1024  # assume the smallest (v7x) if query unavailable
    if cap <= 64 * 1024 * 1024:          # v7x: 64 MiB physical per TC
        return 24 * 1024 * 1024, 48 * 1024 * 1024
    return 64 * 1024 * 1024, 100 * 1024 * 1024   # v5e / v6e: 128 MiB physical


# ------------------------------ shared kernel ---------------------------------
def _matmul_bias_kernel(x_ref, w_ref, b_ref, o_ref, acc_ref):
    # x: [tm, tk], w: [tk, tn], b: [1, tn], o: [tm, tn], acc: [tm, tn] f32
    k = pl.program_id(3)

    @pl.when(k == 0)
    def _init():
        acc_ref[...] = jnp.zeros_like(acc_ref)

    acc_ref[...] += jnp.dot(x_ref[...], w_ref[...],
                            preferred_element_type=jnp.float32)

    @pl.when(k == pl.num_programs(3) - 1)
    def _finalize():
        o_ref[...] = (acc_ref[...] + b_ref[...].astype(jnp.float32)
                      ).astype(o_ref.dtype)


def _batched_matmul_bias(x3, w3, b3):
    """out[b] = x3[b] @ w3[b] + b3[b];  x3:[B,M,K] w3:[B,K,N] b3:[B,1,N]."""
    B, M, K = x3.shape
    N = w3.shape[-1]
    out_dtype = jnp.result_type(x3.dtype, w3.dtype, b3.dtype)

    if _USE_BF16_OPERANDS:
        x3 = x3.astype(jnp.bfloat16)
        w3 = w3.astype(jnp.bfloat16)

    budget, vmem_limit = _vmem_budget()

    # --- K tiling: exact 128-aligned tk, or one full-K block (no pad pass). ---
    if K % 128 == 0:
        tk = _pick_divisor(K, (512, 256, 128))
        grid_k = K // tk
    else:
        tk = K            # block dim == full array dim -> legal, no K garbage
        grid_k = 1

    # --- N (output lanes): lane-dense stores; pad out_shape only. -------------
    n_pad = _round_up(N, 128)
    tn_cands = [c for c in (1024, 512, 256, 128) if c <= n_pad and n_pad % c == 0]
    if n_pad <= 1024:
        tn_cands.append(n_pad)
    tn_cands = sorted(set(tn_cands), reverse=True)

    # --- M tiling: multiples of 8, up to 512, cdiv partial edge blocks. -------
    m_cap = max(8, _round_up(M, 8))
    tm_cands = [c for c in (512, 256, 128, 64, 32, 16, 8) if c <= m_cap]
    if m_cap <= 512:
        tm_cands.append(m_cap)
    tm_cands = sorted(set(tm_cands), reverse=True)

    xsz = x3.dtype.itemsize
    wsz = w3.dtype.itemsize
    bsz = b3.dtype.itemsize
    osz = jnp.dtype(out_dtype).itemsize

    def working_set(tm_, tn_):
        return (2 * tm_ * tk * xsz        # x tiles, double buffered
                + 2 * tk * tn_ * wsz      # w tiles
                + 2 * tm_ * tn_ * osz     # out tiles
                + tm_ * tn_ * 4           # f32 accumulator
                + 2 * tn_ * bsz)          # bias tiles

    tm = tn = None
    for cand_tn in tn_cands:
        for cand_tm in tm_cands:
            if working_set(cand_tm, cand_tn) <= budget:
                tm, tn = cand_tm, cand_tn
                break
        if tm is not None:
            break
    if tm is None:          # last-resort fallback, still correct
        tm, tn = tm_cands[-1], tn_cands[-1]

    grid_m = _cdiv(M, tm)
    grid_n = n_pad // tn

    # v7x has 2 TensorCores sharded over the "parallel" axes: keep >= 2 blocks.
    if B * grid_m * grid_n == 1 and M > 8:
        tm = max(8, _round_up(_cdiv(M, 2), 8))
        grid_m = _cdiv(M, tm)

    cost = pl.CostEstimate(
        flops=2 * B * M * K * N,
        transcendentals=0,
        bytes_accessed=int(x3.size * xsz + w3.size * wsz + b3.size * bsz
                           + B * M * N * osz),
    )

    out = pl.pallas_call(
        _matmul_bias_kernel,
        out_shape=jax.ShapeDtypeStruct((B, M, n_pad), out_dtype),
        grid_spec=pltpu.PrefetchScalarGridSpec(
            num_scalar_prefetch=0,
            grid=(B, grid_m, grid_n, grid_k),
            in_specs=[
                pl.BlockSpec((None, tm, tk), lambda b, i, j, k: (b, i, k)),
                pl.BlockSpec((None, tk, tn), lambda b, i, j, k: (b, k, j)),
                pl.BlockSpec((None, 1, tn), lambda b, i, j, k: (b, 0, j)),
            ],
            out_specs=pl.BlockSpec((None, tm, tn), lambda b, i, j, k: (b, i, j)),
            scratch_shapes=[pltpu.VMEM((tm, tn), jnp.float32)],
        ),
        compiler_params=pltpu.CompilerParams(
            dimension_semantics=("parallel", "parallel", "parallel", "arbitrary"),
            vmem_limit_bytes=vmem_limit,
        ),
        cost_estimate=cost,
    )(x3, w3, b3)

    if n_pad != N:
        out = out[..., :N]
    return out


# --------------------------- plain linear (w.ndim == 2) ----------------------
def _linear_simple(x, w, b):
    """torch.matmul(inputs, weights) + biases  (weights.ndim == 2)."""
    lead = x.shape[:-1]
    din = x.shape[-1]
    dout = w.shape[-1]
    m = int(np.prod(lead)) if lead else 1

    out = _batched_matmul_bias(x.reshape(1, m, din),
                               w.reshape(1, din, dout),
                               b.reshape(1, 1, dout))
    return out.reshape(*lead, dout)


# -------------------- per-(batch, group) linear (w.ndim == 4) ----------------
def _linear_batched(x, w, b):
    B, S, N, Din = x.shape
    Dout = w.shape[-1]

    if Din <= 128 and Dout <= 128 and N <= 16:
        # Small per-group dims: block-diagonal weight -> one near-full-depth
        # MXU pass per tile, lane-dense N*Dout output, contiguous reshapes only.
        x_flat = x.reshape(B, S, N * Din)
        eye = jnp.eye(N, dtype=w.dtype)
        w_bd = (w[:, :, :, None, :] * eye[:, None, :, None]
                ).reshape(B, N * Din, N * Dout)
        b_flat = b.reshape(B, 1, N * Dout)
        out = _batched_matmul_bias(x_flat, w_bd, b_flat)   # [B, S, N*Dout]
        return out.reshape(B, S, N, Dout)

    # Larger per-group dims: fold (B, N) into the batch axis so the shared
    # kernel gives per-(b,n) weight blocks plus K tiling that fit VMEM on all
    # generations.  One cheap major-dim transpose of the activations in/out.
    x_t = jnp.transpose(x, (0, 2, 1, 3)).reshape(B * N, S, Din)
    w_r = w.reshape(B * N, Din, Dout)
    b_r = b.reshape(B * N, 1, Dout)
    out = _batched_matmul_bias(x_t, w_r, b_r)              # [B*N, S, Dout]
    out = out.reshape(B, N, S, Dout)
    return jnp.transpose(out, (0, 2, 1, 3))                # [B, S, N, Dout]


# ----------------------------------- API -------------------------------------
def linear_custom(inputs, parameters):
    """Pallas equivalent of LinearCustom.forward(inputs, parameters)."""
    weights, biases = parameters[0], parameters[1]
    if weights.ndim > 3:
        return _linear_batched(inputs, weights, biases)
    if weights.ndim == 2:
        return _linear_simple(inputs, weights, biases)
    # TODO(synk): weights.ndim == 3 hits torch.matmul's generic batch
    # broadcasting, which is not one of the module's documented branches;
    # fall back to XLA rather than fake a kernel.
    return jnp.matmul(inputs, weights) + biases


if __name__ == "__main__":
    key = jax.random.PRNGKey(0)
    k1, k2, k3, k4, k5, k6, k7, k8, k9 = jax.random.split(key, 9)

    # ---- branch 1: plain linear (weights.ndim == 2) ------------------------
    B, S, Din, Dout = 2, 8, 32, 32
    x_simple = jax.random.normal(k1, (B, S, Din), dtype=jnp.float32)
    w_simple = jax.random.normal(k2, (Din, Dout), dtype=jnp.float32) / np.sqrt(Din)
    b_simple = jax.random.normal(k3, (Dout,), dtype=jnp.float32)

    out_simple = linear_custom(x_simple, (w_simple, b_simple))
    jax.block_until_ready(out_simple)
    ref_simple = jnp.matmul(x_simple, w_simple) + b_simple
    assert out_simple.shape == (B, S, Dout)
    np.testing.assert_allclose(np.asarray(out_simple), np.asarray(ref_simple),
                               rtol=1e-5, atol=1e-5)

    # ---- branch 2: grouped linear, small per-group dims (block-diag path) --
    N = 4
    x_batch = jax.random.normal(k4, (B, S, N, Din), dtype=jnp.float32)
    w_batch = jax.random.normal(k5, (B, N, Din, Dout), dtype=jnp.float32) / np.sqrt(Din)
    b_batch = jax.random.normal(k6, (B, N, Dout), dtype=jnp.float32)

    out_batch = linear_custom(x_batch, (w_batch, b_batch))
    jax.block_until_ready(out_batch)
    ref_batch = jnp.einsum("bsni,bnio->bsno", x_batch, w_batch) + b_batch[:, None]
    assert out_batch.shape == (B, S, N, Dout)
    np.testing.assert_allclose(np.asarray(out_batch), np.asarray(ref_batch),
                               rtol=1e-5, atol=1e-5)

    # ---- branch 2: grouped linear, larger per-group dims (tiled path) ------
    B2, S2, N2, Din2, Dout2 = 2, 16, 2, 256, 256
    x_big = jax.random.normal(k7, (B2, S2, N2, Din2), dtype=jnp.float32)
    w_big = jax.random.normal(k8, (B2, N2, Din2, Dout2), dtype=jnp.float32) / np.sqrt(Din2)
    b_big = jax.random.normal(k9, (B2, N2, Dout2), dtype=jnp.float32)

    out_big = linear_custom(x_big, (w_big, b_big))
    jax.block_until_ready(out_big)
    ref_big = jnp.einsum("bsni,bnio->bsno", x_big, w_big) + b_big[:, None]
    assert out_big.shape == (B2, S2, N2, Dout2)
    np.testing.assert_allclose(np.asarray(out_big), np.asarray(ref_big),
                               rtol=1e-5, atol=1e-4)

    print("KERNEL_OK")
</pallas_src>

<mosaic_0001>
module attributes {stable_mosaic.version = 11 : i64} {
  func.func @_matmul_bias_kernel(%arg0: i32, %arg1: i32, %arg2: i32, %arg3: i32, %arg4: memref<1x8x32xf32, #tpu.memory_space<vmem>>, %arg5: memref<1x32x128xf32, #tpu.memory_space<vmem>>, %arg6: memref<1x1x128xf32, #tpu.memory_space<vmem>>, %arg7: memref<1x8x128xf32, #tpu.memory_space<vmem>>, %arg8: memref<8x128xf32, #tpu.memory_space<vmem>>) attributes {dimension_semantics = [#tpu.dimension_semantics<parallel>, #tpu.dimension_semantics<parallel>, #tpu.dimension_semantics<parallel>, #tpu.dimension_semantics<arbitrary>], iteration_bounds = array<i64: 1, 2, 1, 1>, scalar_prefetch = 0 : i64, scratch_operands = 1 : i64, tpu.core_type = #tpu.core_type<tc>, window_params = [{transform_indices = @transform_0, window_bounds = array<i64: 1, 8, 32>}, {transform_indices = @transform_1, window_bounds = array<i64: 1, 32, 128>}, {transform_indices = @transform_2, window_bounds = array<i64: 1, 1, 128>}, {transform_indices = @transform_3, window_bounds = array<i64: 1, 8, 128>}]} {
    %c0_i32 = arith.constant 0 : i32
    %0 = arith.cmpi eq, %arg3, %c0_i32 : i32
    %1 = arith.extui %0 : i1 to i32
    %c0_i32_0 = arith.constant 0 : i32
    %2 = arith.cmpi ne, %1, %c0_i32_0 : i32
    scf.if %2 {
      %cst_12 = arith.constant 0.000000e+00 : f32
      %14 = vector.broadcast %cst_12 : f32 to vector<8x128xf32>
      %c0_13 = arith.constant 0 : index
      %c0_14 = arith.constant 0 : index
      %15 = vector.load %arg8[%c0_13, %c0_14] : memref<8x128xf32, #tpu.memory_space<vmem>>, vector<8x128xf32>
      tpu.vector_store %arg8[%c0_13, %c0_14], %14 {strides = array<i32>} : memref<8x128xf32, #tpu.memory_space<vmem>>, vector<8x128xf32>,
    } else {
    }
    %c0 = arith.constant 0 : index
    %c0_1 = arith.constant 0 : index
    %3 = vector.load %arg8[%c0, %c0_1] : memref<8x128xf32, #tpu.memory_space<vmem>>, vector<8x128xf32>
    %c0_2 = arith.constant 0 : index
    %c0_3 = arith.constant 0 : index
    %c0_4 = arith.constant 0 : index
    %4 = vector.load %arg4[%c0_2, %c0_3, %c0_4] : memref<1x8x32xf32, #tpu.memory_space<vmem>>, vector<1x8x32xf32>
    %5 = vector.shape_cast %4 : vector<1x8x32xf32> to vector<8x32xf32>
    %c0_5 = arith.constant 0 : index
    %c0_6 = arith.constant 0 : index
    %c0_7 = arith.constant 0 : index
    %6 = vector.load %arg5[%c0_5, %c0_6, %c0_7] : memref<1x32x128xf32, #tpu.memory_space<vmem>>, vector<1x32x128xf32>
    %7 = vector.shape_cast %6 : vector<1x32x128xf32> to vector<32x128xf32>
    %cst = arith.constant dense<0.000000e+00> : vector<8x128xf32>
    %8 = tpu.matmul %5, %7, %cst {dimension_numbers = #tpu.dot_dimension_numbers<[1], [0], [0], [1], [0, 0, 1, 1], [], []>} : vector<8x32xf32>, vector<32x128xf32>, vector<8x128xf32> -> vector<8x128xf32>
    %9 = arith.addf %3, %8 : vector<8x128xf32>
    %c0_8 = arith.constant 0 : index
    %c0_9 = arith.constant 0 : index
    %10 = vector.load %arg8[%c0_8, %c0_9] : memref<8x128xf32, #tpu.memory_space<vmem>>, vector<8x128xf32>
    tpu.vector_store %arg8[%c0_8, %c0_9], %9 {strides = array<i32>} : memref<8x128xf32, #tpu.memory_space<vmem>>, vector<8x128xf32>,
    %c0_i32_10 = arith.constant 0 : i32
    %11 = arith.cmpi eq, %arg3, %c0_i32_10 : i32
    %12 = arith.extui %11 : i1 to i32
    %c0_i32_11 = arith.constant 0 : i32
    %13 = arith.cmpi ne, %12, %c0_i32_11 : i32
    scf.if %13 {
      %c0_12 = arith.constant 0 : index
      %c0_13 = arith.constant 0 : index
      %14 = vector.load %arg8[%c0_12, %c0_13] : memref<8x128xf32, #tpu.memory_space<vmem>>, vector<8x128xf32>
      %c0_14 = arith.constant 0 : index
      %c0_15 = arith.constant 0 : index
      %c0_16 = arith.constant 0 : index
      %15 = vector.load %arg6[%c0_14, %c0_15, %c0_16] : memref<1x1x128xf32, #tpu.memory_space<vmem>>, vector<1x1x128xf32>
      %16 = vector.shape_cast %15 : vector<1x1x128xf32> to vector<1x128xf32>
      %17 = vector.broadcast %16 : vector<1x128xf32> to vector<8x128xf32>
      %18 = arith.addf %14, %17 : vector<8x128xf32>
      %c0_17 = arith.constant 0 : index
      %c0_18 = arith.constant 0 : index
      %c0_19 = arith.constant 0 : index
      %19 = vector.load %arg7[%c0_17, %c0_18, %c0_19] : memref<1x8x128xf32, #tpu.memory_space<vmem>>, vector<1x8x128xf32>
      %20 = vector.shape_cast %19 : vector<1x8x128xf32> to vector<8x128xf32>
      %21 = vector.shape_cast %18 : vector<8x128xf32> to vector<1x8x128xf32>
      tpu.vector_store %arg7[%c0_17, %c0_18, %c0_19], %21 {strides = array<i32>} : memref<1x8x128xf32, #tpu.memory_space<vmem>>, vector<1x8x128xf32>,
    } else {
    }
    return
  }
  func.func @transform_0(%arg0: i32, %arg1: i32, %arg2: i32, %arg3: i32) -> (i32, i32, i32) {
    %c0_i32 = arith.constant 0 : i32
    return %arg0, %arg1, %arg3 : i32, i32, i32
  }
  func.func @transform_1(%arg0: i32, %arg1: i32, %arg2: i32, %arg3: i32) -> (i32, i32, i32) {
    %c0_i32 = arith.constant 0 : i32
    return %arg0, %arg3, %arg2 : i32, i32, i32
  }
  func.func @transform_2(%arg0: i32, %arg1: i32, %arg2: i32, %arg3: i32) -> (i32, i32, i32) {
    %c0_i32 = arith.constant 0 : i32
    %c0_i32_0 = arith.constant 0 : i32
    return %arg0, %c0_i32, %arg2 : i32, i32, i32
  }
  func.func @transform_3(%arg0: i32, %arg1: i32, %arg2: i32, %arg3: i32) -> (i32, i32, i32) {
    %c0_i32 = arith.constant 0 : i32
    return %arg0, %arg1, %arg2 : i32, i32, i32
  }
}

</mosaic_0001>

<llo_original>
// kernel: tpu_custom_call.1
$region0: #{tpu_custom_call.1}
  #allocation0 [shape = 'u32[]', space=smem, size = 0x4, offset = 0x4, fixed_abs, tag = 'smem constant byte address 0x4 - core index']
  #allocation1 [shape = 'u32[72,128]{1,0:T(1,128)}', space=vmem, size = 0x9000, scoped, tag = 'internal scratch']
  #allocation2 [shape = 'f32[8,128]{1,0:T(8,128)}', space=vmem, size = 0x1000, scoped, tag = 'scratch operand']
  %s0 = inlined_call_operand.hbm [shape: f32[1,16,32], index: 0, kind: input, shape index: {}]
  %s1 = inlined_call_operand.hbm [shape: f32[1,32,32], index: 1, kind: input, shape index: {}]
  %s2 = inlined_call_operand.vmem [shape: f32[1,1,32], index: 2, kind: input, shape index: {}]
  %s3 = inlined_call_operand.hbm [shape: f32[1,16,128], index: 3, kind: output, shape index: {}]
  %s4 = sld [smem:[#allocation0]]
  $region61: #{tpu_custom_call.1} parent=0
    _
  %s6 = ssub.s32 1, %s4
  %s7 = scalar_select 0, %s6, %s4
  $region1: #{tpu_custom_call.1} parent=0
    #allocation3 [shape = 'u8[8192]{0}', space=vmem, size = 0x2000, scoped, tag = 'input window, operand 0']
    #allocation4 [shape = 's32[2]{0}', space=sflag, size = 0x8, scoped, tag = 'scoped memory for tpu_custom_call.1']
    #allocation5 [shape = 's32[2]{0}', space=sflag, size = 0x8, scoped, tag = 'scoped memory for tpu_custom_call.1']
    #allocation6 [shape = 'u8[16384]{0}', space=vmem, size = 0x4000, scoped, tag = 'input window, operand 1, single buffered']
    #allocation7 [shape = 's32[1]{0}', space=sflag, size = 0x4, scoped, tag = 'scoped memory for tpu_custom_call.1']
    #allocation8 [shape = 'u8[8192]{0}', space=vmem, size = 0x2000, scoped, tag = 'output window, operand 0']
    %8 = vsyncpa [#allocation4], 0
    %s9 = scalar_lea.sflag [#allocation4], 1
    %10 = vsyncpa %s9, 0
    %11 = vsyncpa [#allocation7], 0
    %12 = vsyncpa [#allocation5], 0
    %s13 = scalar_lea.sflag [#allocation5], 1
    %14 = vsyncpa %s13, 0
    loop: start=0, step=1, limit=4
    $region2: #{tpu_custom_call.1} parent=1 // loop_pre_header
      _
    $region3: #{tpu_custom_call.1} parent=1 // loop_header
      %s16 = sphi 0, %s20
      %p17 = scmp.ge.s32.totalorder %s16, 4
      %s23 = sphi 0, %s49
      %s24 = sphi 0, %s45
      %s25 = sphi 0, %s41
      %s26 = sphi 0, %s37
      %s27 = sphi 0, %s23
      %s28 = sphi 0, %s24
      %s29 = sphi 0, %s25
      %s30 = sphi 0, %s26
      %s31 = sphi 0, %s27
      %s32 = sphi 0, %s28
      %s33 = sphi 0, %s29
      %s34 = sphi 0, %s30
      %s56 = sphi 0, %s58
      %s59 = sphi 0, %s56
      %s60 = sphi 0, %s59
      %s76 = sphi 0, %s60
      %s86 = sphi 0, %s88
      %s89 = sphi 0, %s86
      %s90 = sphi 0, %s89
      %s106 = sphi 0, %s90
      %s114 = sphi 0, %s116
      %s117 = sphi 0, %s114
      %s118 = sphi 0, %s117
      %s134 = sphi 0, %s118
      %s144 = sphi 0, %s146
      %s147 = sphi 0, %s144
      %s148 = sphi 0, %s147
      %s164 = sphi 0, %s148
    $region4: #{tpu_custom_call.1} parent=1 // loop_header_branch
      %19 = sbr.rel (%p17) target = $region8
    $region5: #{tpu_custom_call.1} parent=1 // loop_body
      %s21 = ssub.s32 %s16, 1
      %s22 = ssub.s32 %s16, 2
      %s35 = sadd.s32 1, %s26
      %p36 = scmp.ge.s32.totalorder %s35, 1
      %s37 = scalar_select %p36, 0, %s35
      %s38 = sadd.s32 1, %s25
      %s39 = scalar_select %p36, %s38, %s25
      %p40 = scmp.ge.s32.totalorder %s39, 1
      %s41 = scalar_select %p40, 0, %s39
      %s42 = sadd.s32 1, %s24
      %s43 = scalar_select %p40, %s42, %s24
      %p44 = scmp.ge.s32.totalorder %s43, 2
      %s45 = scalar_select %p44, 0, %s43
      %s46 = sadd.s32 1, %s23
      %s47 = scalar_select %p44, %s46, %s23
      %p48 = scmp.ge.s32.totalorder %s47, 1
      %s49 = scalar_select %p48, 0, %s47
      %s50 = ssub.s32 %s23, %s49
      %s51 = ssub.s32 %s24, %s45
      %s52 = sor.u32 %s50, %s51
      %s53 = ssub.s32 %s26, %s37
      %s54 = sor.u32 %s52, %s53
      %p55 = scmp.eq.s32.totalorder %s54, 0
      %s57 = sadd.s32 %s56, 1
      %s58 = scalar_select %p55, %s56, %s57
      %p61 = pneg %p55
      %p62 = scmp.eq.s32.totalorder %s16, 1
      %p63 = por %p61, %p62
      %p64 = scmp.ne.s32.totalorder %s56, %s59
      %p65 = scmp.eq.s32.totalorder %s16, 0
      %p66 = por %p64, %p65
      %p67 = scmp.ne.s32.totalorder %s56, %s59
      %p68 = scmp.eq.s32.totalorder %s21, 1
      %p69 = por %p67, %p68
      %p70 = scmp.ne.s32.totalorder %s59, %s60
      %p71 = scmp.eq.s32.totalorder %s21, 0
      %p72 = por %p70, %p71
      %p73 = scmp.ne.s32.totalorder %s59, %s60
      %p74 = scmp.eq.s32.totalorder %s22, 1
      %p75 = por %p73, %p74
      %p77 = scmp.ne.s32.totalorder %s60, %s76
      %p78 = scmp.eq.s32.totalorder %s22, 0
      %p79 = por %p77, %p78
      %s80 = ssub.s32 %s23, %s49
      %s81 = ssub.s32 %s26, %s37
      %s82 = sor.u32 %s80, %s81
      %s83 = ssub.s32 %s25, %s41
      %s84 = sor.u32 %s82, %s83
      %p85 = scmp.eq.s32.totalorder %s84, 0
      %s87 = sadd.s32 %s86, 1
      %s88 = scalar_select %p85, %s86, %s87
      %p91 = pneg %p85
      %p92 = scmp.eq.s32.totalorder %s16, 1
      %p93 = por %p91, %p92
      %p94 = scmp.ne.s32.totalorder %s86, %s89
      %p95 = scmp.eq.s32.totalorder %s16, 0
      %p96 = por %p94, %p95
      %p97 = scmp.ne.s32.totalorder %s86, %s89
      %p98 = scmp.eq.s32.totalorder %s21, 1
      %p99 = por %p97, %p98
      %p100 = scmp.ne.s32.totalorder %s89, %s90
      %p101 = scmp.eq.s32.totalorder %s21, 0
      %p102 = por %p100, %p101
      %p103 = scmp.ne.s32.totalorder %s89, %s90
      %p104 = scmp.eq.s32.totalorder %s22, 1
      %p105 = por %p103, %p104
      %p107 = scmp.ne.s32.totalorder %s90, %s106
      %p108 = scmp.eq.s32.totalorder %s22, 0
      %p109 = por %p107, %p108
      %s110 = ssub.s32 %s23, %s49
      %s111 = ssub.s32 %s25, %s41
      %s112 = sor.u32 %s110, %s111
      %p113 = scmp.eq.s32.totalorder %s112, 0
      %s115 = sadd.s32 %s114, 1
      %s116 = scalar_select %p113, %s114, %s115
      %p119 = pneg %p113
      %p120 = scmp.eq.s32.totalorder %s16, 1
      %p121 = por %p119, %p120
      %p122 = scmp.ne.s32.totalorder %s114, %s117
      %p123 = scmp.eq.s32.totalorder %s16, 0
      %p124 = por %p122, %p123
      %p125 = scmp.ne.s32.totalorder %s114, %s117
      %p126 = scmp.eq.s32.totalorder %s21, 1
      %p127 = por %p125, %p126
      %p128 = scmp.ne.s32.totalorder %s117, %s118
      %p129 = scmp.eq.s32.totalorder %s21, 0
      %p130 = por %p128, %p129
      %p131 = scmp.ne.s32.totalorder %s117, %s118
      %p132 = scmp.eq.s32.totalorder %s22, 1
      %p133 = por %p131, %p132
      %p135 = scmp.ne.s32.totalorder %s118, %s134
      %p136 = scmp.eq.s32.totalorder %s22, 0
      %p137 = por %p135, %p136
      %s138 = ssub.s32 %s23, %s49
      %s139 = ssub.s32 %s24, %s45
      %s140 = sor.u32 %s138, %s139
      %s141 = ssub.s32 %s25, %s41
      %s142 = sor.u32 %s140, %s141
      %p143 = scmp.eq.s32.totalorder %s142, 0
      %s145 = sadd.s32 %s144, 1
      %s146 = scalar_select %p143, %s144, %s145
      %p149 = pneg %p143
      %p150 = scmp.eq.s32.totalorder %s16, 1
      %p151 = por %p149, %p150
      %p152 = scmp.ne.s32.totalorder %s144, %s147
      %p153 = scmp.eq.s32.totalorder %s16, 0
      %p154 = por %p152, %p153
      %p155 = scmp.ne.s32.totalorder %s144, %s147
      %p156 = scmp.eq.s32.totalorder %s21, 1
      %p157 = por %p155, %p156
      %p158 = scmp.ne.s32.totalorder %s147, %s148
      %p159 = scmp.eq.s32.totalorder %s21, 0
      %p160 = por %p158, %p159
      %p161 = scmp.ne.s32.totalorder %s147, %s148
      %p162 = scmp.eq.s32.totalorder %s22, 1
      %p163 = por %p161, %p162
      %p165 = scmp.ne.s32.totalorder %s148, %s164
      %p166 = scmp.eq.s32.totalorder %s22, 0
      %p167 = por %p165, %p166
      %p168 = scmp.le.s32.totalorder 1, %s16
      %p169 = scmp.lt.s32.totalorder %s16, 3
      %p170 = pnand %p168, %p169
      %p171 = pneg %p170
      // Predicated region
      $region9: #{tpu_custom_call.1} parent=5 // pred_check
        _
      $region10: #{tpu_custom_call.1} parent=5 // pred_check_branch
        %173 = sbr.rel (%p170) target = $region12
      $region11: #{tpu_custom_call.1} parent=5 // pred_region
        %s174 = ssub.s32 %s16, 1
        // Predicated region
        $region13: #{tpu_custom_call.1} parent=11 // pred_check
          %p175 = pneg %p102
        $region14: #{tpu_custom_call.1} parent=11 // pred_check_branch
          %177 = sbr.rel (%p175) target = $region16
        $region15: #{tpu_custom_call.1} parent=11 // pred_region
          %s178 = smul.u32 4, %s30
          %180 = vsyncadd [#allocation7], 0
          %s181 = sadd.s32 %s29, %s178
          %s182 = smul.addr %s27, 4
          %s183 = sadd.s32 %s181, %s182
          %s184 = smul.addr %s183, 8
          %s185 = scalar_lea.hbm %s1, %s184
          %s186 = sshll.u32 %s185, 4
          %s187 = int_to_ptr.hbm [resolvable:$true] %s186
          %s188 = sshll.u32 [#allocation6], 4
          %s189 = int_to_ptr.vmem [resolvable:$true] %s188
          %194 = dma.hbm_to_vmem [thread:$0]  %s187, 512, %s189, [#allocation7], 128, 128, 8
        $region16: #{tpu_custom_call.1} parent=11 // pred_fallthru
          _
        // Predicated region
        $region17: #{tpu_custom_call.1} parent=11 // pred_check
          %p195 = pneg %p130
        $region18: #{tpu_custom_call.1} parent=11 // pred_check_branch
          %197 = sbr.rel (%p195) target = $region20
        $region19: #{tpu_custom_call.1} parent=11 // pred_region
          %p198 = scmp.lt.s32.totalorder %s27, 0
          %s199 = scalar_select %p198, %s27, 0
          %p200 = scmp.lt.s32.totalorder %s29, 0
          %s201 = scalar_select %p200, %s29, 0
          %s202 = sadd.s32 %s201, %s199
          %s203 = scalar_lea.vmem %s2, %s202
        $region20: #{tpu_custom_call.1} parent=11 // pred_fallthru
          _
      $region12: #{tpu_custom_call.1} parent=5 // pred_fallthru
        _
      %p204 = scmp.lt.s32.totalorder %s16, 2
      // Predicated region
      $region21: #{tpu_custom_call.1} parent=5 // pred_check
        %p205 = pneg %p204
      $region22: #{tpu_custom_call.1} parent=5 // pred_check_branch
        %207 = sbr.rel (%p205) target = $region24
      $region23: #{tpu_custom_call.1} parent=5 // pred_region
        // Predicated region
        $region25: #{tpu_custom_call.1} parent=23 // pred_check
          %p208 = pneg %p66
        $region26: #{tpu_custom_call.1} parent=23 // pred_check_branch
          %210 = sbr.rel (%p208) target = $region28
        $region27: #{tpu_custom_call.1} parent=23 // pred_region
          %s211 = sand.u32 %s56, 1
          %s212 = scalar_lea.sflag [#allocation4], %s211
          %s213 = sand.u32 %s56, 1
          %s214 = smul.addr %s213, 8
          %s215 = scalar_lea.vmem [#allocation3], %s214
          %217 = vsyncadd %s212, 0
          %s218 = sadd.s32 %s26, %s24
          %s219 = smul.addr %s23, 2
          %s220 = sadd.s32 %s218, %s219
          %s221 = smul.addr %s220, 8
          %s222 = scalar_lea.hbm %s0, %s221
          %s224 = sshll.u32 %s222, 4
          %s225 = int_to_ptr.hbm [resolvable:$true] %s224
          %s226 = sshll.u32 %s215, 4
          %s227 = int_to_ptr.vmem [resolvable:$true] %s226
          %229 = dma.hbm_to_vmem [thread:$0]  %s225, 128, %s227, %s212
        $region28: #{tpu_custom_call.1} parent=23 // pred_fallthru
          _
      $region24: #{tpu_custom_call.1} parent=5 // pred_fallthru
        _
      %p230 = scmp.le.s32.totalorder 1, %s16
      %p231 = scmp.lt.s32.totalorder %s16, 3
      %p232 = pnand %p230, %p231
      %p233 = pneg %p232
      // Predicated region
      $region29: #{tpu_custom_call.1} parent=5 // pred_check
        _
      $region30: #{tpu_custom_call.1} parent=5 // pred_check_branch
        %235 = sbr.rel (%p232) target = $region32
      $region31: #{tpu_custom_call.1} parent=5 // pred_region
        %s236 = ssub.s32 %s16, 1
        %s237 = sand.u32 %s59, 1
        %s238 = scalar_lea.sflag [#allocation4], %s237
        %s239 = sand.u32 %s59, 1
        %s240 = smul.addr %s239, 8
        %s241 = scalar_lea.vmem [#allocation3], %s240
        // Predicated region
        $region33: #{tpu_custom_call.1} parent=31 // pred_check
          %p242 = pneg %p72
        $region34: #{tpu_custom_call.1} parent=31 // pred_check_branch
          %244 = sbr.rel (%p242) target = $region36
        $region35: #{tpu_custom_call.1} parent=31 // pred_region
          %246 = dma.done %s238, 128
        $region36: #{tpu_custom_call.1} parent=31 // pred_fallthru
          _
        // Predicated region
        $region37: #{tpu_custom_call.1} parent=31 // pred_check
          %p247 = pneg %p102
        $region38: #{tpu_custom_call.1} parent=31 // pred_check_branch
          %249 = sbr.rel (%p247) target = $region40
        $region39: #{tpu_custom_call.1} parent=31 // pred_region
          %251 = dma.done [#allocation7], 512
        $region40: #{tpu_custom_call.1} parent=31 // pred_fallthru
          _
        %s252 = sand.u32 %s59, 1
        %s253 = scalar_lea.sflag [#allocation4], %s252
        %s254 = sand.u32 %s59, 1
        %s255 = smul.addr %s254, 8
        %s256 = scalar_lea.vmem [#allocation3], %s255
        %p257 = pneg %p72
        %p258 = pneg %p69
        %p259 = pneg %p102
        %p260 = pneg %p99
        %p261 = scmp.lt.s32.totalorder %s27, 0
        %s262 = scalar_select %p261, %s27, 0
        %p263 = scmp.lt.s32.totalorder %s29, 0
        %s264 = scalar_select %p263, %s29, 0
        %s265 = sadd.s32 %s264, %s262
        %s266 = scalar_lea.vmem %s2, %s265
        %p267 = pneg %p130
        %p268 = pneg %p127
        %p269 = pneg %p160
        %p270 = pneg %p157
        %s271 = sand.u32 %s147, 1
        %s272 = scalar_lea.sflag [#allocation5], %s271
        %s273 = sand.u32 %s147, 1
        %s274 = smul.addr %s273, 8
        %s275 = scalar_lea.vmem [#allocation8], %s274
        %s276 = smul.u32 4, %s30
        %p277 = scmp.lt.s32.totalorder %s27, 0
        %s278 = scalar_select %p277, %s27, 0
        %p279 = scmp.lt.s32.totalorder %s29, 0
        %s280 = scalar_select %p279, %s29, 0
        %s281 = sadd.s32 %s280, %s278
        %s282 = scalar_lea.vmem %s2, %s281
        %p283 = scmp.eq.s32.totalorder %s30, 0
        // Predicated region
        $region41: #{tpu_custom_call.1} parent=31 // pred_check
          %p284 = pneg %p283
        $region42: #{tpu_custom_call.1} parent=31 // pred_check_branch
          %286 = sbr.rel (%p284) target = $region44
        $region43: #{tpu_custom_call.1} parent=31 // pred_region
          %287 = vst [vmem:[#allocation2] sm:$0xff] 0.0
        $region44: #{tpu_custom_call.1} parent=31 // pred_fallthru
          _
        %v288 = vld [vmem:[#allocation2] sm:$0xff]
        %v289 = vld [vmem:[%s241] sm:$0xff]
        %v290 = vld [vmem:[#allocation6] sm:$0xff]
        %v291 = vld [vmem:[#allocation6 + $0x8] sm:$0xff]
        %v292 = vld [vmem:[#allocation6 + $0x10] sm:$0xff]
        %v293 = vld [vmem:[#allocation6 + $0x18] sm:$0xff]
        %vm294 = vcmask 261120
        %v296 = vsel %vm294, %v289, 0
        %298 = vmatpush.msra.mxu0 0.0
        %299 = vmatpush.msra.mxu0 0.0
        %300 = vmatpush.msra.mxu0 0.0
        %301 = vmatpush.msra.mxu0 0.0
        %302 = vmatpush.msra.mxu0 0.0
        %303 = vmatpush.msra.mxu0 0.0
        %304 = vmatpush.msra.mxu0 0.0
        %305 = vmatpush.msra.mxu0 0.0
        %306 = vmatpush.msra.mxu0 0.0
        %307 = vmatpush.msra.mxu0 0.0
        %308 = vmatpush.msra.mxu0 0.0
        %309 = vmatpush.msra.mxu0 0.0
        %310 = vmatpush.msra.mxu0 %v293
        %311 = vmatpush.msra.mxu0 %v292
        %312 = vmatpush.msra.mxu0 %v291
        %313 = vmatpush.msra.mxu0 %v290
        %314 = vmatmul.f32.gmra.mxu0 %v296
        %v315 = vpop.f32.mrf.mxu0
        %v316 = vadd.f32 0.0, %v315
        %317 = vdwg.mxu0
        %v318 = vadd.f32 %v288, %v316
        %319 = vst [vmem:[#allocation2] sm:$0xff] %v318
        // Predicated region
        $region45: #{tpu_custom_call.1} parent=31 // pred_check
          %p320 = pneg %p283
        $region46: #{tpu_custom_call.1} parent=31 // pred_check_branch
          %322 = sbr.rel (%p320) target = $region48
        $region47: #{tpu_custom_call.1} parent=31 // pred_region
          %v323 = vld [vmem:[#allocation2] sm:$0xff]
          %v324 = vld [vmem:[%s282] sm:$0x1]
          %v326 = vperm.slane %v324, 0
          %v328 = vadd.f32 %v323, %v326
          %329 = vst [vmem:[%s275] sm:$0xff] %v328
        $region48: #{tpu_custom_call.1} parent=31 // pred_fallthru
          _
        %s330 = sand.u32 %s147, 1
        %s331 = scalar_lea.sflag [#allocation5], %s330
        %s332 = sand.u32 %s147, 1
        %s333 = smul.addr %s332, 8
        %s334 = scalar_lea.vmem [#allocation8], %s333
        // Predicated region
        $region49: #{tpu_custom_call.1} parent=31 // pred_check
          %p335 = pneg %p157
        $region50: #{tpu_custom_call.1} parent=31 // pred_check_branch
          %337 = sbr.rel (%p335) target = $region52
        $region51: #{tpu_custom_call.1} parent=31 // pred_region
          %339 = vsyncadd %s331, 0
          %s340 = sadd.s32 %s29, %s28
          %s341 = smul.addr %s27, 2
          %s342 = sadd.s32 %s340, %s341
          %s343 = smul.addr %s342, 8
          %s344 = scalar_lea.hbm %s3, %s343
          %s346 = sshll.u32 %s334, 4
          %s347 = int_to_ptr.vmem [resolvable:$true] %s346
          %s348 = sshll.u32 %s344, 4
          %s349 = int_to_ptr.hbm [resolvable:$true] %s348
          %351 = dma.vmem_to_hbm [thread:$0]  %s347, 128, %s349, %s331
        $region52: #{tpu_custom_call.1} parent=31 // pred_fallthru
          _
      $region32: #{tpu_custom_call.1} parent=5 // pred_fallthru
        _
      %p352 = scmp.le.s32.totalorder 2, %s16
      // Predicated region
      $region53: #{tpu_custom_call.1} parent=5 // pred_check
        %p353 = pneg %p352
      $region54: #{tpu_custom_call.1} parent=5 // pred_check_branch
        %355 = sbr.rel (%p353) target = $region56
      $region55: #{tpu_custom_call.1} parent=5 // pred_region
        %s356 = ssub.s32 %s16, 2
        // Predicated region
        $region57: #{tpu_custom_call.1} parent=55 // pred_check
          %p357 = pneg %p163
        $region58: #{tpu_custom_call.1} parent=55 // pred_check_branch
          %359 = sbr.rel (%p357) target = $region60
        $region59: #{tpu_custom_call.1} parent=55 // pred_region
          %s360 = sand.u32 %s148, 1
          %s361 = scalar_lea.sflag [#allocation5], %s360
          %s362 = sand.u32 %s148, 1
          %s363 = smul.addr %s362, 8
          %s364 = scalar_lea.vmem [#allocation8], %s363
          %366 = dma.done %s361, 128
        $region60: #{tpu_custom_call.1} parent=55 // pred_fallthru
          _
      $region56: #{tpu_custom_call.1} parent=5 // pred_fallthru
        _
    $region6: #{tpu_custom_call.1} parent=1 // loop_footer
      %s20 = sadd.s32 1, %s16
    $region7: #{tpu_custom_call.1} parent=1 // loop_footer_branch
      %15 = sbr.rel target = $region3
    $region8: #{tpu_custom_call.1} parent=1 // loop_exit
      _
    %367 = vsyncpa [#allocation4], 1
    %s368 = scalar_lea.sflag [#allocation4], 1
    %369 = vsyncpa %s368, 1
    %370 = vsyncpa [#allocation7], 1
    %371 = vsyncpa [#allocation5], 1
    %s372 = scalar_lea.sflag [#allocation5], 1
    %373 = vsyncpa %s372, 1

</llo_original>
